<compile_context>
chip_gen: v7x
topology: tpu7x:2x2x1
jax: 0.10.0
libtpu: 0.0.40
codegen_flags: <defaults>
</compile_context>

<pallas_src>
import math
import jax
import jax.numpy as jnp
from jax.experimental import pallas as pl
from jax.experimental.pallas import tpu as pltpu


def _round_up(x, m):
    return (x + m - 1) // m * m


def _ffn_kernel(x_ref, w1t_ref, b1_ref, w2t_ref, b2_ref, o_ref, acc_ref):
    # Grid: (row tiles, hidden chunks).  Axis 1 is the reduction axis.
    # x_ref:   (tm, D)   bf16 input rows (resident across the H axis)
    # w1t_ref: (D, th)   bf16 chunk of in_proj_weight^T
    # b1_ref:  (1, th)   f32 chunk of in_proj_bias
    # w2t_ref: (th, D)   bf16 chunk of out_proj_weight^T
    # b2_ref:  (1, D)    f32 out_proj_bias
    # o_ref:   (tm, D)   output tile
    # acc_ref: (tm, D)   f32 accumulator scratch
    j = pl.program_id(1)

    @pl.when(j == 0)
    def _():
        acc_ref[...] = jnp.zeros_like(acc_ref)

    # First projection (MXU, bf16 inputs, f32 accumulation), bias + ReLU in f32.
    h = jnp.dot(x_ref[...], w1t_ref[...], preferred_element_type=jnp.float32)
    h = jnp.maximum(h + b1_ref[...], 0.0)
    # TODO(synk): dropout between the two projections omitted (eval / p=0.0).

    # Second projection, accumulate this H-chunk's contribution.
    acc_ref[...] += jnp.dot(h.astype(w2t_ref.dtype), w2t_ref[...],
                            preferred_element_type=jnp.float32)

    @pl.when(j == pl.num_programs(1) - 1)
    def _():
        o_ref[...] = (acc_ref[...] + b2_ref[...]).astype(o_ref.dtype)


def prepare_ffn_params(in_proj_weight, in_proj_bias,
                       out_proj_weight, out_proj_bias,
                       compute_dtype=jnp.bfloat16):
    """One-time parameter prep: transpose to kernel layout, cast matmul
    operands to the MXU compute dtype, keep biases in f32."""
    w1t = jnp.asarray(in_proj_weight).T.astype(compute_dtype)    # (D, H)
    w2t = jnp.asarray(out_proj_weight).T.astype(compute_dtype)   # (H, D)
    b1 = jnp.asarray(in_proj_bias).astype(jnp.float32).reshape(1, -1)   # (1, H)
    b2 = jnp.asarray(out_proj_bias).astype(jnp.float32).reshape(1, -1)  # (1, D)
    return w1t, b1, w2t, b2


def position_wise_ffn(x, w1t, b1, w2t, b2, *, tm=256, th=512):
    """x: (seq_len, batch, model_size).  Params as from prepare_ffn_params().
    Returns (seq_len, batch, model_size) in x.dtype."""
    seq_len, bsz, model_size = x.shape
    D = model_size
    H = w1t.shape[1]
    M = seq_len * bsz
    compute_dtype = w1t.dtype

    x2d = x.reshape(M, D).astype(compute_dtype)

    # --- Row tiling: pad rows to the tile boundary (tail sliced off later). ---
    tm = min(tm, _round_up(M, 8))
    Mp = _round_up(M, tm)
    if Mp != M:
        x2d = jnp.pad(x2d, ((0, Mp - M), (0, 0)))

    # --- Hidden tiling: th must be a multiple of 128 lanes unless it is H. ---
    if th >= H:
        th = H
        Hp = H
    else:
        th = max(128, (th // 128) * 128)
        Hp = _round_up(H, th)
    if Hp != H:
        # Zero padding of the hidden dim is exact: relu(x@0 + 0) = 0 -> adds 0.
        w1t = jnp.pad(w1t, ((0, 0), (0, Hp - H)))
        b1 = jnp.pad(b1, ((0, 0), (0, Hp - H)))
        w2t = jnp.pad(w2t, ((0, Hp - H), (0, 0)))

    grid = (Mp // tm, Hp // th)

    # --- Explicit VMEM budget (double-buffered tiles + scratch + headroom). ---
    cb = jnp.dtype(compute_dtype).itemsize
    ob = jnp.dtype(x.dtype).itemsize
    est = 2 * (tm * D * cb        # x tile
               + D * th * cb      # w1t chunk
               + th * D * cb      # w2t chunk
               + 8 * th * 4       # b1 chunk (sublane-padded)
               + 8 * D * 4        # b2
               + tm * D * ob)     # output tile
    est += tm * D * 4             # accumulator scratch
    est += tm * th * 4            # live f32 hidden intermediate
    vmem_limit = int(min(64 * 1024 * 1024, max(32 * 1024 * 1024, 2 * est)))

    out2d = pl.pallas_call(
        _ffn_kernel,
        out_shape=jax.ShapeDtypeStruct((Mp, D), x.dtype),
        grid_spec=pltpu.PrefetchScalarGridSpec(
            num_scalar_prefetch=0,
            grid=grid,
            in_specs=[
                pl.BlockSpec((tm, D), lambda i, j: (i, 0)),   # x rows
                pl.BlockSpec((D, th), lambda i, j: (0, j)),   # W_in^T chunk
                pl.BlockSpec((1, th), lambda i, j: (0, j)),   # b_in chunk
                pl.BlockSpec((th, D), lambda i, j: (j, 0)),   # W_out^T chunk
                pl.BlockSpec((1, D), lambda i, j: (0, 0)),    # b_out
            ],
            out_specs=pl.BlockSpec((tm, D), lambda i, j: (i, 0)),
            scratch_shapes=[pltpu.VMEM((tm, D), jnp.float32)],
        ),
        compiler_params=pltpu.CompilerParams(
            dimension_semantics=("parallel", "arbitrary"),
            vmem_limit_bytes=vmem_limit,
        ),
    )(x2d, w1t, b1, w2t, b2)

    if Mp != M:
        out2d = out2d[:M]
    return out2d.reshape(seq_len, bsz, model_size)


def make_params(key, model_size, inner_size, dtype=jnp.float32):
    """Deterministic init matching reset_parameters(init='normal'),
    in the original PyTorch (inner, model) / (model, inner) layout."""
    std = math.sqrt(2.0 / (model_size + inner_size))
    k1, k2 = jax.random.split(key)
    in_proj_weight = std * jax.random.normal(k1, (inner_size, model_size), dtype)
    out_proj_weight = std * jax.random.normal(k2, (model_size, inner_size), dtype)
    in_proj_bias = jnp.zeros((inner_size,), dtype)
    out_proj_bias = jnp.zeros((model_size,), dtype)
    return in_proj_weight, in_proj_bias, out_proj_weight, out_proj_bias


if __name__ == "__main__":
    seq_len, bsz = 8, 2
    model_size, inner_size = 128, 256

    key = jax.random.PRNGKey(0)
    kx, kp = jax.random.split(key)
    x = jax.random.normal(kx, (seq_len, bsz, model_size), jnp.float32)
    w1, b1, w2, b2 = make_params(kp, model_size, inner_size)

    # One-time parameter preparation (transpose + bf16 cast hoisted here).
    w1t, b1p, w2t, b2p = prepare_ffn_params(w1, b1, w2, b2)

    out = position_wise_ffn(x, w1t, b1p, w2t, b2p)
    out = jax.block_until_ready(out)
    assert out.shape == (seq_len, bsz, model_size)
    assert out.dtype == x.dtype

    # Pure-JAX reference with matching bf16 matmul inputs / f32 accumulation.
    h_ref = jnp.maximum(
        jnp.dot(x.astype(jnp.bfloat16), w1.T.astype(jnp.bfloat16),
                preferred_element_type=jnp.float32) + b1, 0.0)
    ref = jnp.dot(h_ref.astype(jnp.bfloat16), w2.T.astype(jnp.bfloat16),
                  preferred_element_type=jnp.float32) + b2
    max_err = float(jnp.max(jnp.abs(out - ref)))
    assert jnp.allclose(out, ref, atol=2e-2, rtol=2e-2), max_err

    # Also exercise the padded / multi-chunk path (ragged rows, H > th).
    x2 = jax.random.normal(jax.random.PRNGKey(1), (5, 3, model_size), jnp.float32)
    out2 = jax.block_until_ready(position_wise_ffn(x2, w1t, b1p, w2t, b2p,
                                                   tm=16, th=128))
    h2 = jnp.maximum(
        jnp.dot(x2.astype(jnp.bfloat16), w1.T.astype(jnp.bfloat16),
                preferred_element_type=jnp.float32) + b1, 0.0)
    ref2 = jnp.dot(h2.astype(jnp.bfloat16), w2.T.astype(jnp.bfloat16),
                   preferred_element_type=jnp.float32) + b2
    assert jnp.allclose(out2, ref2, atol=2e-2, rtol=2e-2)

    print("KERNEL_OK")
</pallas_src>

<mosaic_0001>
module attributes {stable_mosaic.version = 11 : i64} {
  func.func @_ffn_kernel(%arg0: i32, %arg1: i32, %arg2: memref<16x128xbf16, #tpu.memory_space<vmem>>, %arg3: memref<128x256xbf16, #tpu.memory_space<vmem>>, %arg4: memref<1x256xf32, #tpu.memory_space<vmem>>, %arg5: memref<256x128xbf16, #tpu.memory_space<vmem>>, %arg6: memref<1x128xf32, #tpu.memory_space<vmem>>, %arg7: memref<16x128xf32, #tpu.memory_space<vmem>>, %arg8: memref<16x128xf32, #tpu.memory_space<vmem>>) attributes {dimension_semantics = [#tpu.dimension_semantics<parallel>, #tpu.dimension_semantics<arbitrary>], iteration_bounds = array<i64: 1, 1>, scalar_prefetch = 0 : i64, scratch_operands = 1 : i64, tpu.core_type = #tpu.core_type<tc>, window_params = [{transform_indices = @transform_0, window_bounds = array<i64: 16, 128>}, {transform_indices = @transform_1, window_bounds = array<i64: 128, 256>}, {transform_indices = @transform_2, window_bounds = array<i64: 1, 256>}, {transform_indices = @transform_3, window_bounds = array<i64: 256, 128>}, {pipeline_mode = #tpu.pipeline_mode<synchronous>, transform_indices = @transform_4, window_bounds = array<i64: 1, 128>}, {transform_indices = @transform_5, window_bounds = array<i64: 16, 128>}]} {
    %c0_i32 = arith.constant 0 : i32
    %0 = arith.cmpi eq, %arg1, %c0_i32 : i32
    %1 = arith.extui %0 : i1 to i32
    %c0_i32_0 = arith.constant 0 : i32
    %2 = arith.cmpi ne, %1, %c0_i32_0 : i32
    scf.if %2 {
      %cst_16 = arith.constant 0.000000e+00 : f32
      %20 = vector.broadcast %cst_16 : f32 to vector<16x128xf32>
      %c0_17 = arith.constant 0 : index
      %c0_18 = arith.constant 0 : index
      %21 = vector.load %arg8[%c0_17, %c0_18] : memref<16x128xf32, #tpu.memory_space<vmem>>, vector<16x128xf32>
      tpu.vector_store %arg8[%c0_17, %c0_18], %20 {strides = array<i32>} : memref<16x128xf32, #tpu.memory_space<vmem>>, vector<16x128xf32>,
    } else {
    }
    %c0 = arith.constant 0 : index
    %c0_1 = arith.constant 0 : index
    %3 = vector.load %arg2[%c0, %c0_1] : memref<16x128xbf16, #tpu.memory_space<vmem>>, vector<16x128xbf16>
    %c0_2 = arith.constant 0 : index
    %c0_3 = arith.constant 0 : index
    %4 = vector.load %arg3[%c0_2, %c0_3] : memref<128x256xbf16, #tpu.memory_space<vmem>>, vector<128x256xbf16>
    %cst = arith.constant dense<0.000000e+00> : vector<16x256xf32>
    %5 = tpu.matmul %3, %4, %cst {dimension_numbers = #tpu.dot_dimension_numbers<[1], [0], [0], [1], [0, 0, 1, 1], [], []>} : vector<16x128xbf16>, vector<128x256xbf16>, vector<16x256xf32> -> vector<16x256xf32>
    %c0_4 = arith.constant 0 : index
    %c0_5 = arith.constant 0 : index
    %6 = vector.load %arg4[%c0_4, %c0_5] : memref<1x256xf32, #tpu.memory_space<vmem>>, vector<1x256xf32>
    %7 = vector.broadcast %6 : vector<1x256xf32> to vector<16x256xf32>
    %8 = arith.addf %5, %7 : vector<16x256xf32>
    %cst_6 = arith.constant 0.000000e+00 : f32
    %9 = vector.broadcast %cst_6 : f32 to vector<16x256xf32>
    %10 = arith.maximumf %8, %9 : vector<16x256xf32>
    %c0_7 = arith.constant 0 : index
    %c0_8 = arith.constant 0 : index
    %11 = vector.load %arg8[%c0_7, %c0_8] : memref<16x128xf32, #tpu.memory_space<vmem>>, vector<16x128xf32>
    %12 = arith.truncf %10 : vector<16x256xf32> to vector<16x256xbf16>
    %c0_9 = arith.constant 0 : index
    %c0_10 = arith.constant 0 : index
    %13 = vector.load %arg5[%c0_9, %c0_10] : memref<256x128xbf16, #tpu.memory_space<vmem>>, vector<256x128xbf16>
    %cst_11 = arith.constant dense<0.000000e+00> : vector<16x128xf32>
    %14 = tpu.matmul %12, %13, %cst_11 {dimension_numbers = #tpu.dot_dimension_numbers<[1], [0], [0], [1], [0, 0, 1, 1], [], []>} : vector<16x256xbf16>, vector<256x128xbf16>, vector<16x128xf32> -> vector<16x128xf32>
    %15 = arith.addf %11, %14 : vector<16x128xf32>
    %c0_12 = arith.constant 0 : index
    %c0_13 = arith.constant 0 : index
    %16 = vector.load %arg8[%c0_12, %c0_13] : memref<16x128xf32, #tpu.memory_space<vmem>>, vector<16x128xf32>
    tpu.vector_store %arg8[%c0_12, %c0_13], %15 {strides = array<i32>} : memref<16x128xf32, #tpu.memory_space<vmem>>, vector<16x128xf32>,
    %c0_i32_14 = arith.constant 0 : i32
    %17 = arith.cmpi eq, %arg1, %c0_i32_14 : i32
    %18 = arith.extui %17 : i1 to i32
    %c0_i32_15 = arith.constant 0 : i32
    %19 = arith.cmpi ne, %18, %c0_i32_15 : i32
    scf.if %19 {
      %c0_16 = arith.constant 0 : index
      %c0_17 = arith.constant 0 : index
      %20 = vector.load %arg8[%c0_16, %c0_17] : memref<16x128xf32, #tpu.memory_space<vmem>>, vector<16x128xf32>
      %c0_18 = arith.constant 0 : index
      %c0_19 = arith.constant 0 : index
      %21 = vector.load %arg6[%c0_18, %c0_19] : memref<1x128xf32, #tpu.memory_space<vmem>>, vector<1x128xf32>
      %22 = vector.broadcast %21 : vector<1x128xf32> to vector<16x128xf32>
      %23 = arith.addf %20, %22 : vector<16x128xf32>
      %c0_20 = arith.constant 0 : index
      %c0_21 = arith.constant 0 : index
      %24 = vector.load %arg7[%c0_20, %c0_21] : memref<16x128xf32, #tpu.memory_space<vmem>>, vector<16x128xf32>
      tpu.vector_store %arg7[%c0_20, %c0_21], %23 {strides = array<i32>} : memref<16x128xf32, #tpu.memory_space<vmem>>, vector<16x128xf32>,
    } else {
    }
    return
  }
  func.func @transform_0(%arg0: i32, %arg1: i32) -> (i32, i32) {
    %c0_i32 = arith.constant 0 : i32
    %c0_i32_0 = arith.constant 0 : i32
    return %arg0, %c0_i32 : i32, i32
  }
  func.func @transform_1(%arg0: i32, %arg1: i32) -> (i32, i32) {
    %c0_i32 = arith.constant 0 : i32
    %c0_i32_0 = arith.constant 0 : i32
    return %c0_i32, %arg1 : i32, i32
  }
  func.func @transform_2(%arg0: i32, %arg1: i32) -> (i32, i32) {
    %c0_i32 = arith.constant 0 : i32
    %c0_i32_0 = arith.constant 0 : i32
    return %c0_i32, %arg1 : i32, i32
  }
  func.func @transform_3(%arg0: i32, %arg1: i32) -> (i32, i32) {
    %c0_i32 = arith.constant 0 : i32
    %c0_i32_0 = arith.constant 0 : i32
    return %arg1, %c0_i32 : i32, i32
  }
  func.func @transform_4(%arg0: i32, %arg1: i32) -> (i32, i32) {
    %c0_i32 = arith.constant 0 : i32
    %c0_i32_0 = arith.constant 0 : i32
    %c0_i32_1 = arith.constant 0 : i32
    return %c0_i32, %c0_i32_0 : i32, i32
  }
  func.func @transform_5(%arg0: i32, %arg1: i32) -> (i32, i32) {
    %c0_i32 = arith.constant 0 : i32
    %c0_i32_0 = arith.constant 0 : i32
    return %arg0, %c0_i32 : i32, i32
  }
}

</mosaic_0001>

<llo_original>
// kernel: tpu_custom_call.1
$region0: #{tpu_custom_call.1}
  #allocation0 [shape = 'u32[]', space=smem, size = 0x4, offset = 0x4, fixed_abs, tag = 'smem constant byte address 0x4 - core index']
  #allocation1 [shape = 'u32[144,128]{1,0:T(1,128)}', space=vmem, size = 0x12000, scoped, tag = 'internal scratch']
  #allocation2 [shape = 'f32[16,128]{1,0:T(8,128)}', space=vmem, size = 0x2000, scoped, tag = 'scratch operand']
  %s0 = inlined_call_operand.hbm [shape: bf16[16,128], index: 0, kind: input, shape index: {}]
  %s1 = inlined_call_operand.hbm [shape: bf16[128,256], index: 1, kind: input, shape index: {}]
  %s2 = inlined_call_operand.vmem [shape: f32[1,256], index: 2, kind: input, shape index: {}]
  %s3 = inlined_call_operand.hbm [shape: bf16[256,128], index: 3, kind: input, shape index: {}]
  %s4 = inlined_call_operand.vmem [shape: f32[1,128], index: 4, kind: input, shape index: {}]
  %s5 = inlined_call_operand.hbm [shape: f32[16,128], index: 5, kind: output, shape index: {}]
  %s6 = sld [smem:[#allocation0]]
  $region50: #{tpu_custom_call.1} parent=0
    _
  %s8 = ssub.s32 1, %s6
  %s9 = scalar_select 0, %s8, %s6
  $region1: #{tpu_custom_call.1} parent=0
    #allocation3 [shape = 'u8[4096]{0}', space=vmem, size = 0x1000, scoped, tag = 'input window, operand 0, single buffered']
    #allocation4 [shape = 's32[1]{0}', space=sflag, size = 0x4, scoped, tag = 'scoped memory for tpu_custom_call.1']
    #allocation5 [shape = 's32[1]{0}', space=sflag, size = 0x4, scoped, tag = 'scoped memory for tpu_custom_call.1']
    #allocation6 [shape = 'u8[65536]{0}', space=vmem, size = 0x10000, scoped, tag = 'input window, operand 1, single buffered']
    #allocation7 [shape = 's32[1]{0}', space=sflag, size = 0x4, scoped, tag = 'scoped memory for tpu_custom_call.1']
    #allocation8 [shape = 'u8[65536]{0}', space=vmem, size = 0x10000, scoped, tag = 'input window, operand 3, single buffered']
    #allocation9 [shape = 'u8[8192]{0}', space=vmem, size = 0x2000, scoped, tag = 'output window, operand 0, single buffered']
    %10 = vsyncpa [#allocation4], 0
    %11 = vsyncpa [#allocation7], 0
    %12 = vsyncpa [#allocation5], 0
    // Predicated region
    $region2: #{tpu_custom_call.1} parent=1 // pred_check
      _
    $region3: #{tpu_custom_call.1} parent=1 // pred_check_branch
      %14 = sbr.rel (0) target = $region5
    $region4: #{tpu_custom_call.1} parent=1 // pred_region
      %s16 = ssub.s32 128, 128
      %17 = vsyncadd [#allocation4], %s16
      %s18 = sshll.u32 [#allocation3], 4
      %s19 = int_to_ptr.vmem [resolvable:$true] %s18
      %24 = dma.hbm_to_vmem [thread:$0]  %s0, 128, %s19, [#allocation4], 64, 64, 4
    $region5: #{tpu_custom_call.1} parent=1 // pred_fallthru
      _
    // Predicated region
    $region6: #{tpu_custom_call.1} parent=1 // pred_check
      _
    $region7: #{tpu_custom_call.1} parent=1 // pred_check_branch
      %26 = sbr.rel (0) target = $region9
    $region8: #{tpu_custom_call.1} parent=1 // pred_region
      %s28 = ssub.s32 2048, 2048
      %29 = vsyncadd [#allocation7], %s28
      %s30 = sshll.u32 [#allocation6], 4
      %s31 = int_to_ptr.vmem [resolvable:$true] %s30
      %36 = dma.hbm_to_vmem [thread:$0]  %s1, 2048, %s31, [#allocation7], 128, 128, 8
    $region9: #{tpu_custom_call.1} parent=1 // pred_fallthru
      _
    // Predicated region
    $region10: #{tpu_custom_call.1} parent=1 // pred_check
      _
    $region11: #{tpu_custom_call.1} parent=1 // pred_check_branch
      %38 = sbr.rel (0) target = $region13
    $region12: #{tpu_custom_call.1} parent=1 // pred_region
      _
    $region13: #{tpu_custom_call.1} parent=1 // pred_fallthru
      _
    // Predicated region
    $region14: #{tpu_custom_call.1} parent=1 // pred_check
      _
    $region15: #{tpu_custom_call.1} parent=1 // pred_check_branch
      %40 = sbr.rel (0) target = $region17
    $region16: #{tpu_custom_call.1} parent=1 // pred_region
      %s42 = ssub.s32 2048, 2048
      %43 = vsyncadd [#allocation7], %s42
      %s44 = sshll.u32 [#allocation8], 4
      %s45 = int_to_ptr.vmem [resolvable:$true] %s44
      %50 = dma.hbm_to_vmem [thread:$0]  %s3, 2048, %s45, [#allocation7], 64, 64, 4
    $region17: #{tpu_custom_call.1} parent=1 // pred_fallthru
      _
    // Predicated region
    $region18: #{tpu_custom_call.1} parent=1 // pred_check
      _
    $region19: #{tpu_custom_call.1} parent=1 // pred_check_branch
      %52 = sbr.rel (0) target = $region21
    $region20: #{tpu_custom_call.1} parent=1 // pred_region
      _
    $region21: #{tpu_custom_call.1} parent=1 // pred_fallthru
      _
    // Predicated region
    $region22: #{tpu_custom_call.1} parent=1 // pred_check
      _
    $region23: #{tpu_custom_call.1} parent=1 // pred_check_branch
      %54 = sbr.rel (0) target = $region25
    $region24: #{tpu_custom_call.1} parent=1 // pred_region
      %55 = dma.done [#allocation4], 128
    $region25: #{tpu_custom_call.1} parent=1 // pred_fallthru
      _
    // Predicated region
    $region26: #{tpu_custom_call.1} parent=1 // pred_check
      _
    $region27: #{tpu_custom_call.1} parent=1 // pred_check_branch
      %57 = sbr.rel (0) target = $region29
    $region28: #{tpu_custom_call.1} parent=1 // pred_region
      %58 = dma.done [#allocation7], 2048
    $region29: #{tpu_custom_call.1} parent=1 // pred_fallthru
      _
    // Predicated region
    $region30: #{tpu_custom_call.1} parent=1 // pred_check
      _
    $region31: #{tpu_custom_call.1} parent=1 // pred_check_branch
      %60 = sbr.rel (0) target = $region33
    $region32: #{tpu_custom_call.1} parent=1 // pred_region
      %61 = dma.done [#allocation7], 2048
    $region33: #{tpu_custom_call.1} parent=1 // pred_fallthru
      _
    %p63 = scmp.eq.s32.totalorder 0, 0
    // Predicated region
    $region34: #{tpu_custom_call.1} parent=1 // pred_check
      %p64 = pneg %p63
    $region35: #{tpu_custom_call.1} parent=1 // pred_check_branch
      %66 = sbr.rel (%p64) target = $region37
    $region36: #{tpu_custom_call.1} parent=1 // pred_region
      %67 = vst [vmem:[#allocation2] sm:$0xff] 0.0
      %68 = vst [vmem:[#allocation2 + $0x8] sm:$0xff] 0.0
    $region37: #{tpu_custom_call.1} parent=1 // pred_fallthru
      _
    %v69 = vld [vmem:[#allocation3] sm:$0xf]
    %v70 = vld [vmem:[#allocation3 + $0x4] sm:$0xf]
    %v71 = vld [vmem:[#allocation6] sm:$0xff]
    %v72 = vld [vmem:[#allocation6 + $0x8] sm:$0xff]
    %v73 = vld [vmem:[#allocation6 + $0x10] sm:$0xff]
    %v74 = vld [vmem:[#allocation6 + $0x18] sm:$0xff]
    %v75 = vld [vmem:[#allocation6 + $0x20] sm:$0xff]
    %v76 = vld [vmem:[#allocation6 + $0x28] sm:$0xff]
    %v77 = vld [vmem:[#allocation6 + $0x30] sm:$0xff]
    %v78 = vld [vmem:[#allocation6 + $0x38] sm:$0xff]
    %v79 = vld [vmem:[#allocation6 + $0x40] sm:$0xff]
    %v80 = vld [vmem:[#allocation6 + $0x48] sm:$0xff]
    %v81 = vld [vmem:[#allocation6 + $0x50] sm:$0xff]
    %v82 = vld [vmem:[#allocation6 + $0x58] sm:$0xff]
    %v83 = vld [vmem:[#allocation6 + $0x60] sm:$0xff]
    %v84 = vld [vmem:[#allocation6 + $0x68] sm:$0xff]
    %v85 = vld [vmem:[#allocation6 + $0x70] sm:$0xff]
    %v86 = vld [vmem:[#allocation6 + $0x78] sm:$0xff]
    %v87 = vld [vmem:[%s2] sm:$0x3]
    %v89 = vlaneseq
    %v90 = vshrl.u32 %v89, 7
    %v91 = vsub.s32 0, %v90
    %v92 = vrot.slane %v87, %v91
    %v93 = vlaneseq
    %v94 = vshrl.u32 %v93, 7
    %v95 = vsub.s32 1, %v94
    %v96 = vrot.slane %v87, %v95
    %v101 = vunpack.c.l.b16 %v69
    %v102 = vunpack.c.l.b16 %v70
    %v103 = vpack.c.b16 %v102, %v101
    %v121 = vunpack.c.l.b16 %v71
    %v122 = vunpack.c.h.b16 %v71
    %v123 = vunpack.c.l.b16 %v72
    %v124 = vunpack.c.h.b16 %v72
    %v125 = vunpack.c.l.b16 %v73
    %v126 = vunpack.c.h.b16 %v73
    %v127 = vunpack.c.l.b16 %v74
    %v128 = vunpack.c.h.b16 %v74
    %v129 = vunpack.c.l.b16 %v75
    %v130 = vunpack.c.h.b16 %v75
    %v131 = vunpack.c.l.b16 %v76
    %v132 = vunpack.c.h.b16 %v76
    %v133 = vunpack.c.l.b16 %v77
    %v134 = vunpack.c.h.b16 %v77
    %v135 = vunpack.c.l.b16 %v78
    %v136 = vunpack.c.h.b16 %v78
    %v137 = vunpack.c.l.b16 %v79
    %v138 = vunpack.c.h.b16 %v79
    %v139 = vunpack.c.l.b16 %v80
    %v140 = vunpack.c.h.b16 %v80
    %v141 = vunpack.c.l.b16 %v81
    %v142 = vunpack.c.h.b16 %v81
    %v143 = vunpack.c.l.b16 %v82
    %v144 = vunpack.c.h.b16 %v82
    %v145 = vunpack.c.l.b16 %v83
    %v146 = vunpack.c.h.b16 %v83
    %v147 = vunpack.c.l.b16 %v84
    %v148 = vunpack.c.h.b16 %v84
    %v149 = vunpack.c.l.b16 %v85
    %v150 = vunpack.c.h.b16 %v85
    %v151 = vunpack.c.l.b16 %v86
    %v152 = vunpack.c.h.b16 %v86
    %v153 = vpack.c.b16 %v123, %v121
    %v154 = vpack.c.b16 %v124, %v122
    %v155 = vpack.c.b16 %v127, %v125
    %v156 = vpack.c.b16 %v128, %v126
    %v157 = vpack.c.b16 %v131, %v129
    %v158 = vpack.c.b16 %v132, %v130
    %v159 = vpack.c.b16 %v135, %v133
    %v160 = vpack.c.b16 %v136, %v134
    %v161 = vpack.c.b16 %v139, %v137
    %v162 = vpack.c.b16 %v140, %v138
    %v163 = vpack.c.b16 %v143, %v141
    %v164 = vpack.c.b16 %v144, %v142
    %v165 = vpack.c.b16 %v147, %v145
    %v166 = vpack.c.b16 %v148, %v146
    %v167 = vpack.c.b16 %v151, %v149
    %v168 = vpack.c.b16 %v152, %v150
    %185 = vmatprep.subr.bf16.mxu0 %v154
    %186 = vmatpush1.bf16.msra.mxu0 %v153
    %187 = vmatprep.subr.bf16.mxu0 %v156
    %188 = vmatpush1.bf16.msra.mxu0 %v155
    %189 = vmatprep.subr.bf16.mxu0 %v158
    %190 = vmatpush1.bf16.msra.mxu0 %v157
    %191 = vmatprep.subr.bf16.mxu0 %v160
    %192 = vmatpush1.bf16.msra.mxu0 %v159
    %193 = vmatprep.subr.bf16.mxu0 %v162
    %194 = vmatpush1.bf16.msra.mxu0 %v161
    %195 = vmatprep.subr.bf16.mxu0 %v164
    %196 = vmatpush1.bf16.msra.mxu0 %v163
    %197 = vmatprep.subr.bf16.mxu0 %v166
    %198 = vmatpush1.bf16.msra.mxu0 %v165
    %199 = vmatprep.subr.bf16.mxu0 %v168
    %200 = vmatpush1.bf16.msra.mxu0 %v167
    %201 = vmatprep.subr.bf16.mxu0 0
    %202 = vmatpush1.bf16.msra.mxu0 0
    %203 = vmatprep.subr.bf16.mxu0 0
    %204 = vmatpush1.bf16.msra.mxu0 0
    %205 = vmatprep.subr.bf16.mxu0 0
    %206 = vmatpush1.bf16.msra.mxu0 0
    %207 = vmatprep.subr.bf16.mxu0 0
    %208 = vmatpush1.bf16.msra.mxu0 0
    %209 = vmatprep.subr.bf16.mxu0 0
    %210 = vmatpush1.bf16.msra.mxu0 0
    %211 = vmatprep.subr.bf16.mxu0 0
    %212 = vmatpush1.bf16.msra.mxu0 0
    %213 = vmatprep.subr.bf16.mxu0 0
    %214 = vmatpush1.bf16.msra.mxu0 0
    %215 = vmatprep.subr.bf16.mxu0 0
    %216 = vmatpush1.bf16.msra.mxu0 0
    %217 = vmatprep.mubr.bf16.mxu0 0
    %218 = vmatmul.mubr.bf16.gmra.mrb[0].mxu0 %v103
    %v219 = vpop.f32.mrb[0].mxu0
    %v220 = vadd.f32 %v92, %v219
    %v221 = vpop.f32.mrb[0].mxu0
    %v222 = vadd.f32 %v96, %v221
    %v223 = vpop.f32.mrb[0].mxu0
    %v224 = vadd.f32 %v92, %v223
    %v225 = vpop.f32.mrb[0].mxu0
    %v226 = vadd.f32 %v96, %v225
    %227 = vdwg.mxu0
    %v228 = vmax.f32 %v220, 0.0
    %v229 = vmax.f32 %v222, 0.0
    %v230 = vmax.f32 %v224, 0.0
    %v231 = vmax.f32 %v226, 0.0
    %v232 = vld [vmem:[#allocation2] sm:$0xff]
    %v233 = vld [vmem:[#allocation2 + $0x8] sm:$0xff]
    %v234 = vpack.c.bf16 %v230, %v228
    %v235 = vpack.c.bf16 %v231, %v229
    %v236 = vld [vmem:[#allocation8] sm:$0xf]
    %v237 = vld [vmem:[#allocation8 + $0x4] sm:$0xf]
    %v238 = vld [vmem:[#allocation8 + $0x8] sm:$0xf]
    %v239 = vld [vmem:[#allocation8 + $0xc] sm:$0xf]
    %v240 = vld [vmem:[#allocation8 + $0x10] sm:$0xf]
    %v241 = vld [vmem:[#allocation8 + $0x14] sm:$0xf]
    %v242 = vld [vmem:[#allocation8 + $0x18] sm:$0xf]
    %v243 = vld [vmem:[#allocation8 + $0x1c] sm:$0xf]
    %v244 = vld [vmem:[#allocation8 + $0x20] sm:$0xf]
    %v245 = vld [vmem:[#allocation8 + $0x24] sm:$0xf]
    %v246 = vld [vmem:[#allocation8 + $0x28] sm:$0xf]
    %v247 = vld [vmem:[#allocation8 + $0x2c] sm:$0xf]
    %v248 = vld [vmem:[#allocation8 + $0x30] sm:$0xf]
    %v249 = vld [vmem:[#allocation8 + $0x34] sm:$0xf]
    %v250 = vld [vmem:[#allocation8 + $0x38] sm:$0xf]
    %v251 = vld [vmem:[#allocation8 + $0x3c] sm:$0xf]
    %v252 = vld [vmem:[#allocation8 + $0x40] sm:$0xf]
    %v253 = vld [vmem:[#allocation8 + $0x44] sm:$0xf]
    %v254 = vld [vmem:[#allocation8 + $0x48] sm:$0xf]
    %v255 = vld [vmem:[#allocation8 + $0x4c] sm:$0xf]
    %v256 = vld [vmem:[#allocation8 + $0x50] sm:$0xf]
    %v257 = vld [vmem:[#allocation8 + $0x54] sm:$0xf]
    %v258 = vld [vmem:[#allocation8 + $0x58] sm:$0xf]
    %v259 = vld [vmem:[#allocation8 + $0x5c] sm:$0xf]
    %v260 = vld [vmem:[#allocation8 + $0x60] sm:$0xf]
    %v261 = vld [vmem:[#allocation8 + $0x64] sm:$0xf]
    %v262 = vld [vmem:[#allocation8 + $0x68] sm:$0xf]
    %v263 = vld [vmem:[#allocation8 + $0x6c] sm:$0xf]
    %v264 = vld [vmem:[#allocation8 + $0x70] sm:$0xf]
    %v265 = vld [vmem:[#allocation8 + $0x74] sm:$0xf]
    %v266 = vld [vmem:[#allocation8 + $0x78] sm:$0xf]
    %v267 = vld [vmem:[#allocation8 + $0x7c] sm:$0xf]
    %v300 = vunpack.c.l.b16 %v236
    %v301 = vunpack.c.l.b16 %v237
    %v302 = vunpack.c.l.b16 %v238
    %v303 = vunpack.c.l.b16 %v239
    %v304 = vunpack.c.l.b16 %v240
    %v305 = vunpack.c.l.b16 %v241
    %v306 = vunpack.c.l.b16 %v242
    %v307 = vunpack.c.l.b16 %v243
    %v308 = vunpack.c.l.b16 %v244
    %v309 = vunpack.c.l.b16 %v245
    %v310 = vunpack.c.l.b16 %v246
    %v311 = vunpack.c.l.b16 %v247
    %v312 = vunpack.c.l.b16 %v248
    %v313 = vunpack.c.l.b16 %v249
    %v314 = vunpack.c.l.b16 %v250
    %v315 = vunpack.c.l.b16 %v251
    %v316 = vunpack.c.l.b16 %v252
    %v317 = vunpack.c.l.b16 %v253
    %v318 = vunpack.c.l.b16 %v254
    %v319 = vunpack.c.l.b16 %v255
    %v320 = vunpack.c.l.b16 %v256
    %v321 = vunpack.c.l.b16 %v257
    %v322 = vunpack.c.l.b16 %v258
    %v323 = vunpack.c.l.b16 %v259
    %v324 = vunpack.c.l.b16 %v260
    %v325 = vunpack.c.l.b16 %v261
    %v326 = vunpack.c.l.b16 %v262
    %v327 = vunpack.c.l.b16 %v263
    %v328 = vunpack.c.l.b16 %v264
    %v329 = vunpack.c.l.b16 %v265
    %v330 = vunpack.c.l.b16 %v266
    %v331 = vunpack.c.l.b16 %v267
    %v332 = vpack.c.b16 %v301, %v300
    %v333 = vpack.c.b16 %v303, %v302
    %v334 = vpack.c.b16 %v305, %v304
    %v335 = vpack.c.b16 %v307, %v306
    %v336 = vpack.c.b16 %v309, %v308
    %v337 = vpack.c.b16 %v311, %v310
    %v338 = vpack.c.b16 %v313, %v312
    %v339 = vpack.c.b16 %v315, %v314
    %v340 = vpack.c.b16 %v317, %v316
    %v341 = vpack.c.b16 %v319, %v318
    %v342 = vpack.c.b16 %v321, %v320
    %v343 = vpack.c.b16 %v323, %v322
    %v344 = vpack.c.b16 %v325, %v324
    %v345 = vpack.c.b16 %v327, %v326
    %v346 = vpack.c.b16 %v329, %v328
    %v347 = vpack.c.b16 %v331, %v330
    %364 = vmatprep.subr.bf16.mxu0 0
    %365 = vmatpush1.bf16.msra.mxu0 %v332
    %366 = vmatprep.subr.bf16.mxu0 0
    %367 = vmatpush1.bf16.msra.mxu0 %v333
    %368 = vmatprep.subr.bf16.mxu0 0
    %369 = vmatpush1.bf16.msra.mxu0 %v334
    %370 = vmatprep.subr.bf16.mxu0 0
    %371 = vmatpush1.bf16.msra.mxu0 %v335
    %372 = vmatprep.subr.bf16.mxu0 0
    %373 = vmatpush1.bf16.msra.mxu0 %v336
    %374 = vmatprep.subr.bf16.mxu0 0
    %375 = vmatpush1.bf16.msra.mxu0 %v337
    %376 = vmatprep.subr.bf16.mxu0 0
    %377 = vmatpush1.bf16.msra.mxu0 %v338
    %378 = vmatprep.subr.bf16.mxu0 0
    %379 = vmatpush1.bf16.msra.mxu0 %v339
    %380 = vmatprep.subr.bf16.mxu0 0
    %381 = vmatpush1.bf16.msra.mxu0 %v340
    %382 = vmatprep.subr.bf16.mxu0 0
    %383 = vmatpush1.bf16.msra.mxu0 %v341
    %384 = vmatprep.subr.bf16.mxu0 0
    %385 = vmatpush1.bf16.msra.mxu0 %v342
    %386 = vmatprep.subr.bf16.mxu0 0
    %387 = vmatpush1.bf16.msra.mxu0 %v343
    %388 = vmatprep.subr.bf16.mxu0 0
    %389 = vmatpush1.bf16.msra.mxu0 %v344
    %390 = vmatprep.subr.bf16.mxu0 0
    %391 = vmatpush1.bf16.msra.mxu0 %v345
    %392 = vmatprep.subr.bf16.mxu0 0
    %393 = vmatpush1.bf16.msra.mxu0 %v346
    %394 = vmatprep.subr.bf16.mxu0 0
    %395 = vmatpush1.bf16.msra.mxu0 %v347
    %396 = vmatprep.mubr.bf16.mxu0 %v235
    %397 = vmatmul.mubr.bf16.gmra.mrb[0].mxu0 %v234
    %v398 = vpop.f32.mrb[0].mxu0
    %v399 = vadd.f32 0.0, %v398
    %v400 = vpop.f32.mrb[0].mxu0
    %v401 = vpop.f32.mrb[0].mxu0
    %v402 = vadd.f32 0.0, %v401
    %v403 = vpop.f32.mrb[0].mxu0
    %404 = vdwg.mxu0
    %v405 = vadd.f32 %v232, %v399
    %v406 = vadd.f32 %v233, %v402
    %407 = vst [vmem:[#allocation2] sm:$0xff] %v405
    %408 = vst [vmem:[#allocation2 + $0x8] sm:$0xff] %v406
    // Predicated region
    $region38: #{tpu_custom_call.1} parent=1 // pred_check
      %p409 = pneg %p63
    $region39: #{tpu_custom_call.1} parent=1 // pred_check_branch
      %411 = sbr.rel (%p409) target = $region41
    $region40: #{tpu_custom_call.1} parent=1 // pred_region
      %v412 = vld [vmem:[#allocation2] sm:$0xff]
      %v413 = vld [vmem:[#allocation2 + $0x8] sm:$0xff]
      %v414 = vld [vmem:[%s4] sm:$0x1]
      %v416 = vlaneseq
      %v417 = vshrl.u32 %v416, 7
      %v418 = vsub.s32 0, %v417
      %v419 = vrot.slane %v414, %v418
      %v421 = vadd.f32 %v412, %v419
      %v422 = vadd.f32 %v413, %v419
      %423 = vst [vmem:[#allocation9] sm:$0xff] %v421
      %424 = vst [vmem:[#allocation9 + $0x8] sm:$0xff] %v422
    $region41: #{tpu_custom_call.1} parent=1 // pred_fallthru
      _
    // Predicated region
    $region42: #{tpu_custom_call.1} parent=1 // pred_check
      _
    $region43: #{tpu_custom_call.1} parent=1 // pred_check_branch
      %426 = sbr.rel (0) target = $region45
    $region44: #{tpu_custom_call.1} parent=1 // pred_region
      %s428 = ssub.s32 256, 256
      %429 = vsyncadd [#allocation5], %s428
      %s430 = sshll.u32 [#allocation9], 4
      %s431 = int_to_ptr.vmem [resolvable:$true] %s430
      %436 = dma.vmem_to_hbm [thread:$0]  %s431, 256, %s5, [#allocation5], 128, 128, 8
    $region45: #{tpu_custom_call.1} parent=1 // pred_fallthru
      _
    // Predicated region
    $region46: #{tpu_custom_call.1} parent=1 // pred_check
      _
    $region47: #{tpu_custom_call.1} parent=1 // pred_check_branch
      %438 = sbr.rel (0) target = $region49
    $region48: #{tpu_custom_call.1} parent=1 // pred_region
      %439 = dma.done [#allocation5], 256
    $region49: #{tpu_custom_call.1} parent=1 // pred_fallthru
      _
    %440 = vsyncpa [#allocation4], 1
    %441 = vsyncpa [#allocation7], 1
    %442 = vsyncpa [#allocation5], 1

</llo_original>
